<compile_context>
chip_gen: v7x
topology: tpu7x:2x2x1
jax: 0.10.0
libtpu: 0.0.40
codegen_flags: <defaults>
</compile_context>

<pallas_src>
import jax
import jax.numpy as jnp
from jax.experimental import pallas as pl
from jax.experimental.pallas import tpu as pltpu


def _round_up(n, m):
    return ((n + m - 1) // m) * m


def _valuenet_kernel(x_ref, w1_ref, b1_ref, w2_ref, b2_ref, o_ref):
    # x: (TM, S)  w1: (S, H)  b1: (1, H)  w2: (H, 1)  b2: SMEM (1,)  o: (TM, 1)
    x = x_ref[...]
    h = jnp.dot(x, w1_ref[...],
                preferred_element_type=jnp.float32) + b1_ref[...]   # (TM, H)
    h = jnp.where(h > 0, h, 0.01 * h)                                # leaky_relu(0.01)
    y = jnp.dot(h, w2_ref[...],
                preferred_element_type=jnp.float32) + b2_ref[0]      # (TM, 1)
    o_ref[...] = y.astype(o_ref.dtype)


def value_net_forward(x, w1, b1, w2, b2, *, tm=None):
    """x: (B, S); w1: (S, H); b1: (H,)|(1,H); w2: (H, 1); b2: (1,)|(1,1) -> (B, 1)."""
    B, S = x.shape
    H = w1.shape[1]
    s_lanes = max(_round_up(S, 128), 128)   # lane-padded width of the x VMEM block

    if tm is None:
        # ~4 MiB of lane-padded x per grid step (e.g. S=32 -> tm=8192).
        tm = max(1024, _round_up((4 * 1024 * 1024) // (4 * s_lanes), 256))
    # v7x-safe cap: 2 double-buffered x blocks <= ~24 MiB (counting lane padding).
    max_tm = (24 * 1024 * 1024) // (2 * 4 * s_lanes)
    tm = max(8, min(tm, (max_tm // 8) * 8))
    # Clamp for small batches; keep the sublane dim 8-aligned (Mosaic requirement).
    tm = _round_up(min(tm, _round_up(B, 8)), 8)
    # Keep at least 2 grid steps so the batch axis can split across v7x's 2 TCs.
    if B > 8 and pl.cdiv(B, tm) < 2:
        tm = _round_up(pl.cdiv(B, 2), 8)

    num_tiles = pl.cdiv(B, tm)
    b_pad = num_tiles * tm
    if b_pad != B:
        # Tail handling: zero-pad the batch, slice the padded rows off after.
        x = jnp.pad(x, ((0, b_pad - B), (0, 0)))

    b1 = b1.reshape(1, H)
    w2 = w2.reshape(H, 1)
    b2 = b2.reshape(1).astype(jnp.float32)

    grid_spec = pltpu.PrefetchScalarGridSpec(
        num_scalar_prefetch=0,
        grid=(num_tiles,),
        in_specs=[
            pl.BlockSpec((tm, S), lambda i: (i, 0)),            # x: tiled, pipelined
            pl.BlockSpec((S, H), lambda i: (0, 0)),             # w1: VMEM-resident
            pl.BlockSpec((1, H), lambda i: (0, 0)),             # b1: VMEM-resident
            pl.BlockSpec((H, 1), lambda i: (0, 0)),             # w2: VMEM-resident
            pl.BlockSpec(memory_space=pltpu.MemorySpace.SMEM),  # b2: SMEM scalar
        ],
        out_specs=pl.BlockSpec((tm, 1), lambda i: (i, 0)),
    )

    out = pl.pallas_call(
        _valuenet_kernel,
        out_shape=jax.ShapeDtypeStruct((b_pad, 1), jnp.float32),
        grid_spec=grid_spec,
        compiler_params=pltpu.CompilerParams(
            dimension_semantics=("parallel",)),
    )(x, w1, b1, w2, b2)

    return out[:B]


def init_params(key, state_dim, hidden=64):
    # Deterministic synthetic init (PyTorch-style uniform(-1/sqrt(fan_in), +)).
    k1, k2, k3, k4 = jax.random.split(key, 4)
    lim1 = 1.0 / jnp.sqrt(jnp.float32(state_dim))
    lim2 = 1.0 / jnp.sqrt(jnp.float32(hidden))
    w1 = jax.random.uniform(k1, (state_dim, hidden), jnp.float32, -lim1, lim1)
    b1 = jax.random.uniform(k2, (1, hidden), jnp.float32, -lim1, lim1)
    w2 = jax.random.uniform(k3, (hidden, 1), jnp.float32, -lim2, lim2)
    b2 = jax.random.uniform(k4, (1, 1), jnp.float32, -lim2, lim2)
    return w1, b1, w2, b2


if __name__ == "__main__":
    key = jax.random.PRNGKey(0)
    kx, kp = jax.random.split(key)

    batch, state_dim, hidden = 20, 32, 64
    x = jax.random.normal(kx, (batch, state_dim), jnp.float32)
    w1, b1, w2, b2 = init_params(kp, state_dim, hidden)

    # Pure-JAX reference.
    h_ref = x @ w1 + b1
    h_ref = jnp.where(h_ref > 0, h_ref, 0.01 * h_ref)
    y_ref = h_ref @ w2 + b2

    # Default path (S-scaled tile, clamped to the batch; grid split into 2 tiles).
    out = jax.block_until_ready(value_net_forward(x, w1, b1, w2, b2))
    assert out.shape == (batch, 1)
    assert jnp.allclose(out, y_ref, atol=1e-4, rtol=1e-4)

    # Explicit multi-tile path: tm=8 -> 3 tiles with a zero-padded tail tile.
    out_tiled = jax.block_until_ready(
        value_net_forward(x, w1, b1, w2, b2, tm=8))
    assert out_tiled.shape == (batch, 1)
    assert jnp.allclose(out_tiled, y_ref, atol=1e-4, rtol=1e-4)

    print("KERNEL_OK")
</pallas_src>

<mosaic_0001>
module attributes {stable_mosaic.version = 11 : i64} {
  func.func @_valuenet_kernel(%arg0: i32, %arg1: memref<16x32xf32, #tpu.memory_space<vmem>>, %arg2: memref<32x64xf32, #tpu.memory_space<vmem>>, %arg3: memref<1x64xf32, #tpu.memory_space<vmem>>, %arg4: memref<64x1xf32, #tpu.memory_space<vmem>>, %arg5: memref<1xf32, #tpu.memory_space<smem>>, %arg6: memref<16x1xf32, #tpu.memory_space<vmem>>) attributes {dimension_semantics = [#tpu.dimension_semantics<parallel>], iteration_bounds = array<i64: 2>, scalar_prefetch = 0 : i64, scratch_operands = 0 : i64, tpu.core_type = #tpu.core_type<tc>, window_params = [{transform_indices = @transform_0, window_bounds = array<i64: 16, 32>}, {pipeline_mode = #tpu.pipeline_mode<synchronous>, transform_indices = @transform_1, window_bounds = array<i64: 32, 64>}, {pipeline_mode = #tpu.pipeline_mode<synchronous>, transform_indices = @transform_2, window_bounds = array<i64: 1, 64>}, {pipeline_mode = #tpu.pipeline_mode<synchronous>, transform_indices = @transform_3, window_bounds = array<i64: 64, 1>}, {transform_indices = @transform_4, window_bounds = array<i64: 1>}, {transform_indices = @transform_5, window_bounds = array<i64: 16, 1>}]} {
    %c0 = arith.constant 0 : index
    %c0_0 = arith.constant 0 : index
    %0 = vector.load %arg1[%c0, %c0_0] : memref<16x32xf32, #tpu.memory_space<vmem>>, vector<16x32xf32>
    %c0_1 = arith.constant 0 : index
    %c0_2 = arith.constant 0 : index
    %1 = vector.load %arg2[%c0_1, %c0_2] : memref<32x64xf32, #tpu.memory_space<vmem>>, vector<32x64xf32>
    %cst = arith.constant dense<0.000000e+00> : vector<16x64xf32>
    %2 = tpu.matmul %0, %1, %cst {dimension_numbers = #tpu.dot_dimension_numbers<[1], [0], [0], [1], [0, 0, 1, 1], [], []>} : vector<16x32xf32>, vector<32x64xf32>, vector<16x64xf32> -> vector<16x64xf32>
    %c0_3 = arith.constant 0 : index
    %c0_4 = arith.constant 0 : index
    %3 = vector.load %arg3[%c0_3, %c0_4] : memref<1x64xf32, #tpu.memory_space<vmem>>, vector<1x64xf32>
    %4 = vector.broadcast %3 : vector<1x64xf32> to vector<16x64xf32>
    %5 = arith.addf %2, %4 : vector<16x64xf32>
    %cst_5 = arith.constant 0.000000e+00 : f32
    %6 = vector.broadcast %cst_5 : f32 to vector<16x64xf32>
    %7 = arith.cmpf ogt, %5, %6 : vector<16x64xf32>
    %cst_6 = arith.constant 0.00999999977 : f32
    %8 = vector.broadcast %cst_6 : f32 to vector<16x64xf32>
    %9 = arith.mulf %8, %5 : vector<16x64xf32>
    %10 = arith.select %7, %5, %9 : vector<16x64xi1>, vector<16x64xf32>
    %c0_7 = arith.constant 0 : index
    %c0_8 = arith.constant 0 : index
    %11 = vector.load %arg4[%c0_7, %c0_8] : memref<64x1xf32, #tpu.memory_space<vmem>>, vector<64x1xf32>
    %cst_9 = arith.constant dense<0.000000e+00> : vector<16x1xf32>
    %12 = tpu.matmul %10, %11, %cst_9 {dimension_numbers = #tpu.dot_dimension_numbers<[1], [0], [0], [1], [0, 0, 1, 1], [], []>} : vector<16x64xf32>, vector<64x1xf32>, vector<16x1xf32> -> vector<16x1xf32>
    %c0_10 = arith.constant 0 : index
    %13 = memref.load %arg5[%c0_10] : memref<1xf32, #tpu.memory_space<smem>>
    %14 = vector.broadcast %13 : f32 to vector<16x1xf32>
    %15 = arith.addf %12, %14 : vector<16x1xf32>
    %c0_11 = arith.constant 0 : index
    %c0_12 = arith.constant 0 : index
    %16 = vector.load %arg6[%c0_11, %c0_12] : memref<16x1xf32, #tpu.memory_space<vmem>>, vector<16x1xf32>
    tpu.vector_store %arg6[%c0_11, %c0_12], %15 {strides = array<i32>} : memref<16x1xf32, #tpu.memory_space<vmem>>, vector<16x1xf32>,
    return
  }
  func.func @transform_0(%arg0: i32) -> (i32, i32) {
    %c0_i32 = arith.constant 0 : i32
    %c0_i32_0 = arith.constant 0 : i32
    return %arg0, %c0_i32 : i32, i32
  }
  func.func @transform_1(%arg0: i32) -> (i32, i32) {
    %c0_i32 = arith.constant 0 : i32
    %c0_i32_0 = arith.constant 0 : i32
    %c0_i32_1 = arith.constant 0 : i32
    return %c0_i32, %c0_i32_0 : i32, i32
  }
  func.func @transform_2(%arg0: i32) -> (i32, i32) {
    %c0_i32 = arith.constant 0 : i32
    %c0_i32_0 = arith.constant 0 : i32
    %c0_i32_1 = arith.constant 0 : i32
    return %c0_i32, %c0_i32_0 : i32, i32
  }
  func.func @transform_3(%arg0: i32) -> (i32, i32) {
    %c0_i32 = arith.constant 0 : i32
    %c0_i32_0 = arith.constant 0 : i32
    %c0_i32_1 = arith.constant 0 : i32
    return %c0_i32, %c0_i32_0 : i32, i32
  }
  func.func @transform_4(%arg0: i32) -> i32 {
    %c0_i32 = arith.constant 0 : i32
    %c0_i32_0 = arith.constant 0 : i32
    return %c0_i32 : i32
  }
  func.func @transform_5(%arg0: i32) -> (i32, i32) {
    %c0_i32 = arith.constant 0 : i32
    %c0_i32_0 = arith.constant 0 : i32
    return %arg0, %c0_i32 : i32, i32
  }
}

</mosaic_0001>

<llo_original>
// kernel: tpu_custom_call.1
$region0: #{tpu_custom_call.1}
  #allocation0 [shape = 'u32[]', space=smem, size = 0x4, offset = 0x4, fixed_abs, tag = 'smem constant byte address 0x4 - core index']
  #allocation1 [shape = 'u32[144,128]{1,0:T(1,128)}', space=vmem, size = 0x12000, scoped, tag = 'internal scratch']
  #allocation2 [shape = 'f32[1]{0:T(128)S(6)}', space=smem, size = 0x200, scoped, tag = 'scoped memory for tpu_custom_call.1']
  %s0 = inlined_call_operand.vmem [shape: f32[32,32], index: 0, kind: input, shape index: {}]
  %s1 = inlined_call_operand.vmem [shape: f32[32,64], index: 1, kind: input, shape index: {}]
  %s2 = inlined_call_operand.vmem [shape: f32[1,64], index: 2, kind: input, shape index: {}]
  %s3 = inlined_call_operand.vmem [shape: f32[64,1], index: 3, kind: input, shape index: {}]
  %s4 = inlined_call_operand.<no memory space> [shape: f32[1], index: 4, kind: input, shape index: {}]
  %s5 = inlined_call_operand.vmem [shape: f32[32,1], index: 5, kind: output, shape index: {}]
  %s6 = sld [smem:[#allocation0]]
  $region53: #{tpu_custom_call.1} parent=0
    _
  %s8 = ssub.s32 1, %s6
  %s9 = scalar_select 0, %s8, %s6
  %10 = sst [smem:[#allocation2]] %s4
  loop: start=0, step=1, limit=4
  $region2: #{tpu_custom_call.1} parent=0 // loop_pre_header
    _
  $region3: #{tpu_custom_call.1} parent=0 // loop_header
    %s12 = sphi 0, %s16
    %p13 = scmp.ge.s32.totalorder %s12, 4
    %s22 = sphi 0, %s24
    %s25 = sphi 0, %s22
    %s26 = sphi 0, %s25
    %s42 = sphi 0, %s26
    %s46 = sphi 0, %s46
    %s48 = sphi 0, %s46
    %s49 = sphi 0, %s48
    %s63 = sphi 0, %s49
    %s67 = sphi 0, %s67
    %s69 = sphi 0, %s67
    %s70 = sphi 0, %s69
    %s84 = sphi 0, %s70
    %s88 = sphi 0, %s88
    %s90 = sphi 0, %s88
    %s91 = sphi 0, %s90
    %s105 = sphi 0, %s91
    %s109 = sphi 0, %s109
    %s111 = sphi 0, %s109
    %s112 = sphi 0, %s111
    %s126 = sphi 0, %s112
    %s132 = sphi 0, %s134
    %s135 = sphi 0, %s132
    %s136 = sphi 0, %s135
    %s152 = sphi 0, %s136
  $region4: #{tpu_custom_call.1} parent=0 // loop_header_branch
    %15 = sbr.rel (%p13) target = $region8
  $region5: #{tpu_custom_call.1} parent=0 // loop_body
    %s17 = ssub.s32 %s12, 1
    %s18 = ssub.s32 %s12, 2
    %s19 = sadd.s32 %s12, 1
    %s20 = ssub.s32 %s12, %s19
    %p21 = scmp.eq.s32.totalorder %s20, 0
    %s23 = sadd.s32 %s22, 1
    %s24 = scalar_select %p21, %s22, %s23
    %p27 = pneg %p21
    %p28 = scmp.eq.s32.totalorder %s12, 1
    %p29 = por %p27, %p28
    %p30 = scmp.ne.s32.totalorder %s22, %s25
    %p31 = scmp.eq.s32.totalorder %s12, 0
    %p32 = por %p30, %p31
    %p33 = scmp.ne.s32.totalorder %s22, %s25
    %p34 = scmp.eq.s32.totalorder %s17, 1
    %p35 = por %p33, %p34
    %p36 = scmp.ne.s32.totalorder %s25, %s26
    %p37 = scmp.eq.s32.totalorder %s17, 0
    %p38 = por %p36, %p37
    %p39 = scmp.ne.s32.totalorder %s25, %s26
    %p40 = scmp.eq.s32.totalorder %s18, 1
    %p41 = por %p39, %p40
    %p43 = scmp.ne.s32.totalorder %s26, %s42
    %p44 = scmp.eq.s32.totalorder %s18, 0
    %p45 = por %p43, %p44
    %s47 = sadd.s32 %s46, 1
    %p50 = scmp.eq.s32.totalorder %s12, 1
    %p51 = scmp.ne.s32.totalorder %s46, %s48
    %p52 = scmp.eq.s32.totalorder %s12, 0
    %p53 = por %p51, %p52
    %p54 = scmp.ne.s32.totalorder %s46, %s48
    %p55 = scmp.eq.s32.totalorder %s17, 1
    %p56 = por %p54, %p55
    %p57 = scmp.ne.s32.totalorder %s48, %s49
    %p58 = scmp.eq.s32.totalorder %s17, 0
    %p59 = por %p57, %p58
    %p60 = scmp.ne.s32.totalorder %s48, %s49
    %p61 = scmp.eq.s32.totalorder %s18, 1
    %p62 = por %p60, %p61
    %p64 = scmp.ne.s32.totalorder %s49, %s63
    %p65 = scmp.eq.s32.totalorder %s18, 0
    %p66 = por %p64, %p65
    %s68 = sadd.s32 %s67, 1
    %p71 = scmp.eq.s32.totalorder %s12, 1
    %p72 = scmp.ne.s32.totalorder %s67, %s69
    %p73 = scmp.eq.s32.totalorder %s12, 0
    %p74 = por %p72, %p73
    %p75 = scmp.ne.s32.totalorder %s67, %s69
    %p76 = scmp.eq.s32.totalorder %s17, 1
    %p77 = por %p75, %p76
    %p78 = scmp.ne.s32.totalorder %s69, %s70
    %p79 = scmp.eq.s32.totalorder %s17, 0
    %p80 = por %p78, %p79
    %p81 = scmp.ne.s32.totalorder %s69, %s70
    %p82 = scmp.eq.s32.totalorder %s18, 1
    %p83 = por %p81, %p82
    %p85 = scmp.ne.s32.totalorder %s70, %s84
    %p86 = scmp.eq.s32.totalorder %s18, 0
    %p87 = por %p85, %p86
    %s89 = sadd.s32 %s88, 1
    %p92 = scmp.eq.s32.totalorder %s12, 1
    %p93 = scmp.ne.s32.totalorder %s88, %s90
    %p94 = scmp.eq.s32.totalorder %s12, 0
    %p95 = por %p93, %p94
    %p96 = scmp.ne.s32.totalorder %s88, %s90
    %p97 = scmp.eq.s32.totalorder %s17, 1
    %p98 = por %p96, %p97
    %p99 = scmp.ne.s32.totalorder %s90, %s91
    %p100 = scmp.eq.s32.totalorder %s17, 0
    %p101 = por %p99, %p100
    %p102 = scmp.ne.s32.totalorder %s90, %s91
    %p103 = scmp.eq.s32.totalorder %s18, 1
    %p104 = por %p102, %p103
    %p106 = scmp.ne.s32.totalorder %s91, %s105
    %p107 = scmp.eq.s32.totalorder %s18, 0
    %p108 = por %p106, %p107
    %s110 = sadd.s32 %s109, 1
    %p113 = scmp.eq.s32.totalorder %s12, 1
    %p114 = scmp.ne.s32.totalorder %s109, %s111
    %p115 = scmp.eq.s32.totalorder %s12, 0
    %p116 = por %p114, %p115
    %p117 = scmp.ne.s32.totalorder %s109, %s111
    %p118 = scmp.eq.s32.totalorder %s17, 1
    %p119 = por %p117, %p118
    %p120 = scmp.ne.s32.totalorder %s111, %s112
    %p121 = scmp.eq.s32.totalorder %s17, 0
    %p122 = por %p120, %p121
    %p123 = scmp.ne.s32.totalorder %s111, %s112
    %p124 = scmp.eq.s32.totalorder %s18, 1
    %p125 = por %p123, %p124
    %p127 = scmp.ne.s32.totalorder %s112, %s126
    %p128 = scmp.eq.s32.totalorder %s18, 0
    %p129 = por %p127, %p128
    %s130 = ssub.s32 %s12, %s19
    %p131 = scmp.eq.s32.totalorder %s130, 0
    %s133 = sadd.s32 %s132, 1
    %s134 = scalar_select %p131, %s132, %s133
    %p137 = pneg %p131
    %p138 = scmp.eq.s32.totalorder %s12, 1
    %p139 = por %p137, %p138
    %p140 = scmp.ne.s32.totalorder %s132, %s135
    %p141 = scmp.eq.s32.totalorder %s12, 0
    %p142 = por %p140, %p141
    %p143 = scmp.ne.s32.totalorder %s132, %s135
    %p144 = scmp.eq.s32.totalorder %s17, 1
    %p145 = por %p143, %p144
    %p146 = scmp.ne.s32.totalorder %s135, %s136
    %p147 = scmp.eq.s32.totalorder %s17, 0
    %p148 = por %p146, %p147
    %p149 = scmp.ne.s32.totalorder %s135, %s136
    %p150 = scmp.eq.s32.totalorder %s18, 1
    %p151 = por %p149, %p150
    %p153 = scmp.ne.s32.totalorder %s136, %s152
    %p154 = scmp.eq.s32.totalorder %s18, 0
    %p155 = por %p153, %p154
    %p156 = scmp.le.s32.totalorder 1, %s12
    %p157 = scmp.lt.s32.totalorder %s12, 3
    %p158 = pnand %p156, %p157
    %p159 = pneg %p158
    // Predicated region
    $region9: #{tpu_custom_call.1} parent=5 // pred_check
      _
    $region10: #{tpu_custom_call.1} parent=5 // pred_check_branch
      %161 = sbr.rel (%p158) target = $region12
    $region11: #{tpu_custom_call.1} parent=5 // pred_region
      %s162 = ssub.s32 %s12, 1
      // Predicated region
      $region13: #{tpu_custom_call.1} parent=11 // pred_check
        %p163 = pneg %p59
      $region14: #{tpu_custom_call.1} parent=11 // pred_check_branch
        %165 = sbr.rel (%p163) target = $region16
      $region15: #{tpu_custom_call.1} parent=11 // pred_region
        _
      $region16: #{tpu_custom_call.1} parent=11 // pred_fallthru
        _
      // Predicated region
      $region17: #{tpu_custom_call.1} parent=11 // pred_check
        %p166 = pneg %p80
      $region18: #{tpu_custom_call.1} parent=11 // pred_check_branch
        %168 = sbr.rel (%p166) target = $region20
      $region19: #{tpu_custom_call.1} parent=11 // pred_region
        _
      $region20: #{tpu_custom_call.1} parent=11 // pred_fallthru
        _
      // Predicated region
      $region21: #{tpu_custom_call.1} parent=11 // pred_check
        %p169 = pneg %p101
      $region22: #{tpu_custom_call.1} parent=11 // pred_check_branch
        %171 = sbr.rel (%p169) target = $region24
      $region23: #{tpu_custom_call.1} parent=11 // pred_region
        _
      $region24: #{tpu_custom_call.1} parent=11 // pred_fallthru
        _
      // Predicated region
      $region25: #{tpu_custom_call.1} parent=11 // pred_check
        %p172 = pneg %p122
      $region26: #{tpu_custom_call.1} parent=11 // pred_check_branch
        %174 = sbr.rel (%p172) target = $region28
      $region27: #{tpu_custom_call.1} parent=11 // pred_region
        _
      $region28: #{tpu_custom_call.1} parent=11 // pred_fallthru
        _
    $region12: #{tpu_custom_call.1} parent=5 // pred_fallthru
      _
    %p175 = scmp.lt.s32.totalorder %s12, 2
    // Predicated region
    $region29: #{tpu_custom_call.1} parent=5 // pred_check
      %p176 = pneg %p175
    $region30: #{tpu_custom_call.1} parent=5 // pred_check_branch
      %178 = sbr.rel (%p176) target = $region32
    $region31: #{tpu_custom_call.1} parent=5 // pred_region
      // Predicated region
      $region33: #{tpu_custom_call.1} parent=31 // pred_check
        %p179 = pneg %p32
      $region34: #{tpu_custom_call.1} parent=31 // pred_check_branch
        %181 = sbr.rel (%p179) target = $region36
      $region35: #{tpu_custom_call.1} parent=31 // pred_region
        %s182 = smul.u32 2, %s12
        %p183 = scmp.lt.s32.totalorder %s182, 3
        %s184 = scalar_select %p183, %s182, 3
        %s185 = smul.addr %s184, 8
        %s186 = scalar_lea.vmem %s0, %s185
        %s187 = smul.u32 2, %s12
      $region36: #{tpu_custom_call.1} parent=31 // pred_fallthru
        _
    $region32: #{tpu_custom_call.1} parent=5 // pred_fallthru
      _
    %p188 = scmp.le.s32.totalorder 1, %s12
    %p189 = scmp.lt.s32.totalorder %s12, 3
    %p190 = pnand %p188, %p189
    %p191 = pneg %p190
    // Predicated region
    $region37: #{tpu_custom_call.1} parent=5 // pred_check
      _
    $region38: #{tpu_custom_call.1} parent=5 // pred_check_branch
      %193 = sbr.rel (%p190) target = $region40
    $region39: #{tpu_custom_call.1} parent=5 // pred_region
      %s194 = ssub.s32 %s12, 1
      %s195 = smul.u32 2, %s17
      %p196 = scmp.lt.s32.totalorder %s195, 3
      %s197 = scalar_select %p196, %s195, 3
      %s198 = smul.addr %s197, 8
      %s199 = scalar_lea.vmem %s0, %s198
      %p200 = pneg %p38
      %p201 = pneg %p35
      %p202 = pneg %p59
      %p203 = pneg %p56
      %p204 = pneg %p80
      %p205 = pneg %p77
      %p206 = pneg %p101
      %p207 = pneg %p98
      %p208 = pneg %p122
      %p209 = pneg %p119
      %p210 = pneg %p148
      %p211 = pneg %p145
      %s212 = smul.u32 2, %s17
      %p213 = scmp.lt.s32.totalorder %s212, 3
      %s214 = scalar_select %p213, %s212, 3
      %s215 = smul.addr %s214, 8
      %s216 = scalar_lea.vmem %s5, %s215
      %s217 = smul.u32 2, %s17
      %p218 = scmp.lt.s32.totalorder %s217, 3
      %s219 = scalar_select %p218, %s217, 3
      %s220 = smul.addr %s219, 8
      %s221 = scalar_lea.vmem %s0, %s220
      %s222 = smul.u32 2, %s17
      %s223 = smul.u32 2, %s17
      %p224 = scmp.lt.s32.totalorder %s223, 3
      %s225 = scalar_select %p224, %s223, 3
      %s226 = smul.addr %s225, 8
      %s227 = scalar_lea.vmem %s5, %s226
      %s228 = smul.u32 2, %s17
      %v229 = vld [vmem:[%s221] sm:$0xff]
      %v230 = vld [vmem:[%s221 + $0x8] sm:$0xff]
      %v231 = vld [vmem:[%s1] sm:$0xff]
      %v232 = vld [vmem:[%s1 + $0x8] sm:$0xff]
      %v233 = vld [vmem:[%s1 + $0x10] sm:$0xff]
      %v234 = vld [vmem:[%s1 + $0x18] sm:$0xff]
      %v235 = vld [vmem:[%s2] sm:$0x1]
      %v237 = vlaneseq
      %v238 = vshrl.u32 %v237, 7
      %v239 = vsub.s32 0, %v238
      %v240 = vrot.slane %v235, %v239
      %vm242 = vcmask 261120
      %v244 = vsel %vm242, %v229, 0
      %v247 = vsel %vm242, %v230, 0
      %249 = vmatprep.subr.mxu0 0.0
      %250 = vmatpush1.msra.mxu0 %v231
      %251 = vmatprep.subr.mxu0 0.0
      %252 = vmatpush1.msra.mxu0 %v232
      %253 = vmatprep.subr.mxu0 0.0
      %254 = vmatpush1.msra.mxu0 %v233
      %255 = vmatprep.subr.mxu0 0.0
      %256 = vmatpush1.msra.mxu0 %v234
      %257 = vmatprep.subr.mxu0 0.0
      %258 = vmatpush1.msra.mxu0 0.0
      %259 = vmatprep.subr.mxu0 0.0
      %260 = vmatpush1.msra.mxu0 0.0
      %261 = vmatprep.subr.mxu0 0.0
      %262 = vmatpush1.msra.mxu0 0.0
      %263 = vmatprep.subr.mxu0 0.0
      %264 = vmatpush1.msra.mxu0 0.0
      %265 = vmatprep.subr.mxu0 0.0
      %266 = vmatpush1.msra.mxu0 0.0
      %267 = vmatprep.subr.mxu0 0.0
      %268 = vmatpush1.msra.mxu0 0.0
      %269 = vmatprep.subr.mxu0 0.0
      %270 = vmatpush1.msra.mxu0 0.0
      %271 = vmatprep.subr.mxu0 0.0
      %272 = vmatpush1.msra.mxu0 0.0
      %273 = vmatprep.subr.mxu0 0.0
      %274 = vmatpush1.msra.mxu0 0.0
      %275 = vmatprep.subr.mxu0 0.0
      %276 = vmatpush1.msra.mxu0 0.0
      %277 = vmatprep.subr.mxu0 0.0
      %278 = vmatpush1.msra.mxu0 0.0
      %279 = vmatprep.subr.mxu0 0.0
      %280 = vmatpush1.msra.mxu0 0.0
      %281 = vmatprep.subr.mxu0 0.0
      %282 = vmatpush1.msra.mxu0 0.0
      %283 = vmatprep.subr.mxu0 0.0
      %284 = vmatpush1.msra.mxu0 0.0
      %285 = vmatprep.subr.mxu0 0.0
      %286 = vmatpush1.msra.mxu0 0.0
      %287 = vmatprep.subr.mxu0 0.0
      %288 = vmatpush1.msra.mxu0 0.0
      %289 = vmatprep.subr.mxu0 0.0
      %290 = vmatpush1.msra.mxu0 0.0
      %291 = vmatprep.subr.mxu0 0.0
      %292 = vmatpush1.msra.mxu0 0.0
      %293 = vmatprep.subr.mxu0 0.0
      %294 = vmatpush1.msra.mxu0 0.0
      %295 = vmatprep.subr.mxu0 0.0
      %296 = vmatpush1.msra.mxu0 0.0
      %297 = vmatprep.subr.mxu0 0.0
      %298 = vmatpush1.msra.mxu0 0.0
      %299 = vmatprep.subr.mxu0 0.0
      %300 = vmatpush1.msra.mxu0 0.0
      %301 = vmatprep.subr.mxu0 0.0
      %302 = vmatpush1.msra.mxu0 0.0
      %303 = vmatprep.subr.mxu0 0.0
      %304 = vmatpush1.msra.mxu0 0.0
      %305 = vmatprep.subr.mxu0 0.0
      %306 = vmatpush1.msra.mxu0 0.0
      %307 = vmatprep.subr.mxu0 0.0
      %308 = vmatpush1.msra.mxu0 0.0
      %309 = vmatprep.subr.mxu0 0.0
      %310 = vmatpush1.msra.mxu0 0.0
      %311 = vmatprep.subr.mxu0 0.0
      %312 = vmatpush1.msra.mxu0 0.0
      %313 = vmatprep.mubr.f32.mxu0 0.0
      %314 = vmatmul.mubr.f32.gmra.mrb[0].mxu0 %v244
      %v315 = vpop.f32.mrb[0].mxu0
      %v316 = vadd.f32 %v240, %v315
      %v317 = vpop.f32.mrb[0].mxu0
      %318 = vmatprep.mubr.f32.mxu0 0.0
      %319 = vmatmul.mubr.f32.gmra.mrb[0].mxu0 %v247
      %v320 = vpop.f32.mrb[0].mxu0
      %v321 = vadd.f32 %v240, %v320
      %v322 = vpop.f32.mrb[0].mxu0
      %323 = vdwg.mxu0
      %vm324 = vcmp.gt.f32.partialorder %v316, 0.0
      %vm325 = vcmp.gt.f32.partialorder %v321, 0.0
      %v326 = vmul.f32 %v316, 0.01
      %v327 = vmul.f32 %v321, 0.01
      %v328 = vsel %vm324, %v316, %v326
      %v329 = vsel %vm325, %v321, %v327
      %v330 = vld [vmem:[%s3] sm:$0xff]
      %v331 = vld [vmem:[%s3 + $0x8] sm:$0xff]
      %v332 = vld [vmem:[%s3 + $0x10] sm:$0xff]
      %v333 = vld [vmem:[%s3 + $0x18] sm:$0xff]
      %v334 = vld [vmem:[%s3 + $0x20] sm:$0xff]
      %v335 = vld [vmem:[%s3 + $0x28] sm:$0xff]
      %v336 = vld [vmem:[%s3 + $0x30] sm:$0xff]
      %v337 = vld [vmem:[%s3 + $0x38] sm:$0xff]
      %s338 = sld [smem:[#allocation2]]
      %v339 = vstv %s338
      %vm340 = vcmask 523264
      %v342 = vsel %vm340, %v328, 0
      %v345 = vsel %vm340, %v329, 0
      %347 = vmatprep.subr.mxu0 0.0
      %348 = vmatpush1.msra.mxu0 %v330
      %349 = vmatprep.subr.mxu0 0.0
      %350 = vmatpush1.msra.mxu0 %v331
      %351 = vmatprep.subr.mxu0 0.0
      %352 = vmatpush1.msra.mxu0 %v332
      %353 = vmatprep.subr.mxu0 0.0
      %354 = vmatpush1.msra.mxu0 %v333
      %355 = vmatprep.subr.mxu0 0.0
      %356 = vmatpush1.msra.mxu0 %v334
      %357 = vmatprep.subr.mxu0 0.0
      %358 = vmatpush1.msra.mxu0 %v335
      %359 = vmatprep.subr.mxu0 0.0
      %360 = vmatpush1.msra.mxu0 %v336
      %361 = vmatprep.subr.mxu0 0.0
      %362 = vmatpush1.msra.mxu0 %v337
      %363 = vmatprep.subr.mxu0 0.0
      %364 = vmatpush1.msra.mxu0 0.0
      %365 = vmatprep.subr.mxu0 0.0
      %366 = vmatpush1.msra.mxu0 0.0
      %367 = vmatprep.subr.mxu0 0.0
      %368 = vmatpush1.msra.mxu0 0.0
      %369 = vmatprep.subr.mxu0 0.0
      %370 = vmatpush1.msra.mxu0 0.0
      %371 = vmatprep.subr.mxu0 0.0
      %372 = vmatpush1.msra.mxu0 0.0
      %373 = vmatprep.subr.mxu0 0.0
      %374 = vmatpush1.msra.mxu0 0.0
      %375 = vmatprep.subr.mxu0 0.0
      %376 = vmatpush1.msra.mxu0 0.0
      %377 = vmatprep.subr.mxu0 0.0
      %378 = vmatpush1.msra.mxu0 0.0
      %379 = vmatprep.subr.mxu0 0.0
      %380 = vmatpush1.msra.mxu0 0.0
      %381 = vmatprep.subr.mxu0 0.0
      %382 = vmatpush1.msra.mxu0 0.0
      %383 = vmatprep.subr.mxu0 0.0
      %384 = vmatpush1.msra.mxu0 0.0
      %385 = vmatprep.subr.mxu0 0.0
      %386 = vmatpush1.msra.mxu0 0.0
      %387 = vmatprep.subr.mxu0 0.0
      %388 = vmatpush1.msra.mxu0 0.0
      %389 = vmatprep.subr.mxu0 0.0
      %390 = vmatpush1.msra.mxu0 0.0
      %391 = vmatprep.subr.mxu0 0.0
      %392 = vmatpush1.msra.mxu0 0.0
      %393 = vmatprep.subr.mxu0 0.0
      %394 = vmatpush1.msra.mxu0 0.0
      %395 = vmatprep.subr.mxu0 0.0
      %396 = vmatpush1.msra.mxu0 0.0
      %397 = vmatprep.subr.mxu0 0.0
      %398 = vmatpush1.msra.mxu0 0.0
      %399 = vmatprep.subr.mxu0 0.0
      %400 = vmatpush1.msra.mxu0 0.0
      %401 = vmatprep.subr.mxu0 0.0
      %402 = vmatpush1.msra.mxu0 0.0
      %403 = vmatprep.subr.mxu0 0.0
      %404 = vmatpush1.msra.mxu0 0.0
      %405 = vmatprep.subr.mxu0 0.0
      %406 = vmatpush1.msra.mxu0 0.0
      %407 = vmatprep.subr.mxu0 0.0
      %408 = vmatpush1.msra.mxu0 0.0
      %409 = vmatprep.subr.mxu0 0.0
      %410 = vmatpush1.msra.mxu0 0.0
      %411 = vmatprep.mubr.f32.mxu0 0.0
      %412 = vmatmul.mubr.f32.gmra.mrb[0].mxu0 %v342
      %v413 = vpop.f32.mrb[0].mxu0
      %v414 = vadd.f32 %v339, %v413
      %v415 = vpop.f32.mrb[0].mxu0
      %416 = vmatprep.mubr.f32.mxu0 0.0
      %417 = vmatmul.mubr.f32.gmra.mrb[0].mxu0 %v345
      %v418 = vpop.f32.mrb[0].mxu0
      %v419 = vadd.f32 %v339, %v418
      %v420 = vpop.f32.mrb[0].mxu0
      %421 = vdwg.mxu0
      %vm422 = vcmask 7168
      %423 = vst.msk [vmem:[%s227] sm:$0xff] %vm422, %v414
      %424 = vst.msk [vmem:[%s227 + $0x8] sm:$0xff] %vm422, %v419
      %s425 = smul.u32 2, %s17
      %p426 = scmp.lt.s32.totalorder %s425, 3
      %s427 = scalar_select %p426, %s425, 3
      %s428 = smul.addr %s427, 8
      %s429 = scalar_lea.vmem %s5, %s428
      // Predicated region
      $region41: #{tpu_custom_call.1} parent=39 // pred_check
        %p430 = pneg %p145
      $region42: #{tpu_custom_call.1} parent=39 // pred_check_branch
        %432 = sbr.rel (%p430) target = $region44
      $region43: #{tpu_custom_call.1} parent=39 // pred_region
        %s433 = smul.u32 2, %s17
      $region44: #{tpu_custom_call.1} parent=39 // pred_fallthru
        _
    $region40: #{tpu_custom_call.1} parent=5 // pred_fallthru
      _
    %p434 = scmp.le.s32.totalorder 2, %s12
    // Predicated region
    $region45: #{tpu_custom_call.1} parent=5 // pred_check
      %p435 = pneg %p434
    $region46: #{tpu_custom_call.1} parent=5 // pred_check_branch
      %437 = sbr.rel (%p435) target = $region48
    $region47: #{tpu_custom_call.1} parent=5 // pred_region
      %s438 = ssub.s32 %s12, 2
      // Predicated region
      $region49: #{tpu_custom_call.1} parent=47 // pred_check
        %p439 = pneg %p151
      $region50: #{tpu_custom_call.1} parent=47 // pred_check_branch
        %441 = sbr.rel (%p439) target = $region52
      $region51: #{tpu_custom_call.1} parent=47 // pred_region
        %s442 = smul.u32 2, %s18
        %p443 = scmp.lt.s32.totalorder %s442, 3
        %s444 = scalar_select %p443, %s442, 3
        %s445 = smul.addr %s444, 8
        %s446 = scalar_lea.vmem %s5, %s445
      $region52: #{tpu_custom_call.1} parent=47 // pred_fallthru
        _
    $region48: #{tpu_custom_call.1} parent=5 // pred_fallthru
      _
  $region6: #{tpu_custom_call.1} parent=0 // loop_footer
    %s16 = sadd.s32 1, %s12
  $region7: #{tpu_custom_call.1} parent=0 // loop_footer_branch
    %11 = sbr.rel target = $region3
  $region8: #{tpu_custom_call.1} parent=0 // loop_exit
    _

</llo_original>
